<compile_context>
chip_gen: v5e
topology: v5e:2x2
jax: 0.10.0
libtpu: 0.0.40
codegen_flags: <defaults>
</compile_context>

<pallas_src>
import numpy as np
import jax
import jax.numpy as jnp
from jax.experimental import pallas as pl
from jax.experimental.pallas import tpu as pltpu  # noqa: F401  (TPU backend)

# ----------------------------- problem sizes -------------------------------
BATCH = 2
SEQ_LEN = 16          # seq_len
PRED_LEN = 8          # pred_len
ENC_IN = 4            # enc_in (channels)
KERNEL_SIZE = 3       # decomposition kernel size (individual=False)


# ------------------------------- kernel ------------------------------------
def dlinear_kernel(x_ref, w_ref, b_ref, out_ref):
    """Single invocation for the whole batch.

    x_ref   : (B, L*C)   flattened input (time-major, channel-minor)
    w_ref   : (L*C, P)   fully folded weight (decomp + linears + channel proj)
    b_ref   : (1, P)     fully folded bias
    out_ref : (B, P)     lane-dense output
    """
    out_ref[...] = (
        jnp.dot(x_ref[...], w_ref[...], preferred_element_type=jnp.float32)
        + b_ref[...]
    )


# --------------------------- parameter folding ------------------------------
def _avg_pool_matrix(L, k):
    """L x L matrix of AvgPool1d(k, stride=1) with edge-replication padding."""
    pad = (k - 1) // 2
    m = np.zeros((L, L), dtype=np.float64)
    for l in range(L):
        for j in range(k):
            idx = min(max(l - pad + j, 0), L - 1)
            m[l, idx] += 1.0 / k
    return m


def fold_params(ws, bs, wt, bt, wd, bd):
    """Fold decomposition, both time-linears, biases and the channel
    projection into a single (L*C, P) weight and a (1, P) bias.
    Done once, in float64 numpy, for exactness."""
    ws = np.asarray(ws, np.float64)   # (P, L)
    wt = np.asarray(wt, np.float64)   # (P, L)
    bs = np.asarray(bs, np.float64)   # (P, 1)
    bt = np.asarray(bt, np.float64)   # (P, 1)
    wd = np.asarray(wd, np.float64)   # (1, C)
    bd = np.asarray(bd, np.float64)   # (1, 1)

    P, L = ws.shape
    C = wd.shape[1]

    M = _avg_pool_matrix(L, KERNEL_SIZE)                 # (L, L)
    I = np.eye(L, dtype=np.float64)
    w_eff = ws @ (I - M) + wt @ M                        # (P, L)

    # W_full[(l, c), p] = w_eff[p, l] * wd[0, c]
    w_full = (w_eff.T[:, None, :] * wd[0][None, :, None]).reshape(L * C, P)
    b_fused = ((bs + bt) * wd.sum() + bd[0, 0]).T        # (1, P)

    return (jnp.asarray(w_full, jnp.float32),
            jnp.asarray(b_fused, jnp.float32))


# ------------------------------ forward -------------------------------------
def dlinear_forward(x, w_full, b_fused):
    """x: (B, L, C) float32 -> (B, P) float32."""
    B, L, C = x.shape
    P = w_full.shape[1]
    x2 = x.reshape(B, L * C)   # contiguous merge of (L, C) -> free reshape

    return pl.pallas_call(
        dlinear_kernel,
        out_shape=jax.ShapeDtypeStruct((B, P), jnp.float32),
        grid=(1,),  # single grid step: whole batch at once
        in_specs=[
            pl.BlockSpec((B, L * C), lambda i: (0, 0)),
            pl.BlockSpec((L * C, P), lambda i: (0, 0)),
            pl.BlockSpec((1, P), lambda i: (0, 0)),
        ],
        out_specs=pl.BlockSpec((B, P), lambda i: (0, 0)),
    )(x2, w_full, b_fused)


# --------------------------- reference (numpy f64) ---------------------------
def reference_forward(x, ws, bs, wt, bt, wd, bd):
    """Exact re-implementation of Model.forward in float64 numpy."""
    x = np.asarray(x, np.float64)
    ws = np.asarray(ws, np.float64)
    wt = np.asarray(wt, np.float64)
    bs = np.asarray(bs, np.float64)
    bt = np.asarray(bt, np.float64)
    wd = np.asarray(wd, np.float64)
    bd = np.asarray(bd, np.float64)

    B, L, C = x.shape
    pad = (KERNEL_SIZE - 1) // 2
    front = np.repeat(x[:, :1, :], pad, axis=1)
    end = np.repeat(x[:, -1:, :], pad, axis=1)
    xp = np.concatenate([front, x, end], axis=1)         # (B, L+2*pad, C)
    mean = (xp[:, 0:L] + xp[:, 1:L + 1] + xp[:, 2:L + 2]) / KERNEL_SIZE
    res = x - mean

    s = np.einsum('pl,blc->bpc', ws, res) + bs[None, :, :]
    t = np.einsum('pl,blc->bpc', wt, mean) + bt[None, :, :]
    dec = s + t                                          # (B, P, C)
    out = np.einsum('bpc,c->bp', dec, wd[0]) + bd[0, 0]  # (B, P)
    return out


# --------------------------------- main --------------------------------------
if __name__ == "__main__":
    key = jax.random.PRNGKey(0)
    k_x, k_bs, k_bt, k_wd, k_bd = jax.random.split(key, 5)

    # deterministic parameters (shapes per Model.__init__, individual=False)
    # Linear_Seasonal / Linear_Trend weights are explicitly set to 1/seq_len
    ws = jnp.full((PRED_LEN, SEQ_LEN), 1.0 / SEQ_LEN, dtype=jnp.float32)
    wt = jnp.full((PRED_LEN, SEQ_LEN), 1.0 / SEQ_LEN, dtype=jnp.float32)
    bound_lin = 1.0 / (SEQ_LEN ** 0.5)
    bs = jax.random.uniform(k_bs, (PRED_LEN, 1), jnp.float32,
                            -bound_lin, bound_lin)
    bt = jax.random.uniform(k_bt, (PRED_LEN, 1), jnp.float32,
                            -bound_lin, bound_lin)
    # dense_feature: Linear(enc_in, 1)
    bound_d = 1.0 / (ENC_IN ** 0.5)
    wd = jax.random.uniform(k_wd, (1, ENC_IN), jnp.float32, -bound_d, bound_d)
    bd = jax.random.uniform(k_bd, (1, 1), jnp.float32, -bound_d, bound_d)

    # deterministic input, layout [B, L, C]
    x = jax.random.normal(k_x, (BATCH, SEQ_LEN, ENC_IN), dtype=jnp.float32)

    # fold all parameters once (done offline in a real deployment)
    w_full, b_fused = fold_params(ws, bs, wt, bt, wd, bd)

    out = dlinear_forward(x, w_full, b_fused)
    out = jax.block_until_ready(out)

    ref = reference_forward(x, ws, bs, wt, bt, wd, bd)
    assert out.shape == (BATCH, PRED_LEN)
    assert np.allclose(np.asarray(out), ref, atol=1e-4, rtol=1e-4), (out, ref)

    print("KERNEL_OK")
</pallas_src>

<mosaic_0001>
module attributes {stable_mosaic.version = 11 : i64} {
  func.func @dlinear_kernel(%arg0: i32, %arg1: memref<2x64xf32, #tpu.memory_space<vmem>>, %arg2: memref<64x8xf32, #tpu.memory_space<vmem>>, %arg3: memref<1x8xf32, #tpu.memory_space<vmem>>, %arg4: memref<2x8xf32, #tpu.memory_space<vmem>>) attributes {dimension_semantics = [#tpu.dimension_semantics<arbitrary>], iteration_bounds = array<i64: 1>, scalar_prefetch = 0 : i64, scratch_operands = 0 : i64, tpu.core_type = #tpu.core_type<tc>, window_params = [{pipeline_mode = #tpu.pipeline_mode<synchronous>, transform_indices = @transform_0, window_bounds = array<i64: 2, 64>}, {pipeline_mode = #tpu.pipeline_mode<synchronous>, transform_indices = @transform_1, window_bounds = array<i64: 64, 8>}, {pipeline_mode = #tpu.pipeline_mode<synchronous>, transform_indices = @transform_2, window_bounds = array<i64: 1, 8>}, {pipeline_mode = #tpu.pipeline_mode<synchronous>, transform_indices = @transform_3, window_bounds = array<i64: 2, 8>}]} {
    %c0 = arith.constant 0 : index
    %c0_0 = arith.constant 0 : index
    %0 = vector.load %arg1[%c0, %c0_0] : memref<2x64xf32, #tpu.memory_space<vmem>>, vector<2x64xf32>
    %c0_1 = arith.constant 0 : index
    %c0_2 = arith.constant 0 : index
    %1 = vector.load %arg2[%c0_1, %c0_2] : memref<64x8xf32, #tpu.memory_space<vmem>>, vector<64x8xf32>
    %cst = arith.constant dense<0.000000e+00> : vector<2x8xf32>
    %2 = tpu.matmul %0, %1, %cst {dimension_numbers = #tpu.dot_dimension_numbers<[1], [0], [0], [1], [0, 0, 1, 1], [], []>} : vector<2x64xf32>, vector<64x8xf32>, vector<2x8xf32> -> vector<2x8xf32>
    %c0_3 = arith.constant 0 : index
    %c0_4 = arith.constant 0 : index
    %3 = vector.load %arg3[%c0_3, %c0_4] : memref<1x8xf32, #tpu.memory_space<vmem>>, vector<1x8xf32>
    %4 = vector.broadcast %3 : vector<1x8xf32> to vector<2x8xf32>
    %5 = arith.addf %2, %4 : vector<2x8xf32>
    %c0_5 = arith.constant 0 : index
    %c0_6 = arith.constant 0 : index
    %6 = vector.load %arg4[%c0_5, %c0_6] : memref<2x8xf32, #tpu.memory_space<vmem>>, vector<2x8xf32>
    tpu.vector_store %arg4[%c0_5, %c0_6], %5 {strides = array<i32>} : memref<2x8xf32, #tpu.memory_space<vmem>>, vector<2x8xf32>,
    return
  }
  func.func @transform_0(%arg0: i32) -> (i32, i32) {
    %c0_i32 = arith.constant 0 : i32
    %c0_i32_0 = arith.constant 0 : i32
    %c0_i32_1 = arith.constant 0 : i32
    return %c0_i32, %c0_i32_0 : i32, i32
  }
  func.func @transform_1(%arg0: i32) -> (i32, i32) {
    %c0_i32 = arith.constant 0 : i32
    %c0_i32_0 = arith.constant 0 : i32
    %c0_i32_1 = arith.constant 0 : i32
    return %c0_i32, %c0_i32_0 : i32, i32
  }
  func.func @transform_2(%arg0: i32) -> (i32, i32) {
    %c0_i32 = arith.constant 0 : i32
    %c0_i32_0 = arith.constant 0 : i32
    %c0_i32_1 = arith.constant 0 : i32
    return %c0_i32, %c0_i32_0 : i32, i32
  }
  func.func @transform_3(%arg0: i32) -> (i32, i32) {
    %c0_i32 = arith.constant 0 : i32
    %c0_i32_0 = arith.constant 0 : i32
    %c0_i32_1 = arith.constant 0 : i32
    return %c0_i32, %c0_i32_0 : i32, i32
  }
}

</mosaic_0001>

<llo_original>
// kernel: tpu_custom_call.1
$region0: #{tpu_custom_call.1}
  #allocation0 [shape = 'u32[]', space=smem, size = 0x4, offset = 0x4, fixed_abs, tag = 'smem constant byte address 0x4 - core index']
  #allocation1 [shape = 'u32[72,128]{1,0:T(1,128)}', space=vmem, size = 0x9000, scoped, tag = 'internal scratch']
  %s0 = inlined_call_operand.vmem [shape: f32[2,64], index: 0, kind: input, shape index: {}]
  %s1 = inlined_call_operand.vmem [shape: f32[64,8], index: 1, kind: input, shape index: {}]
  %s2 = inlined_call_operand.vmem [shape: f32[1,8], index: 2, kind: input, shape index: {}]
  %s3 = inlined_call_operand.hbm [shape: f32[2,8], index: 3, kind: output, shape index: {}]
  %s4 = sld [smem:[#allocation0]]
  $region22: #{tpu_custom_call.1} parent=0
    _
  %s6 = ssub.s32 1, %s4
  %s7 = scalar_select 0, %s6, %s4
  $region1: #{tpu_custom_call.1} parent=0
    #allocation2 [shape = 'u8[1024]{0}', space=vmem, size = 0x400, scoped, tag = 'output window, operand 0, single buffered']
    #allocation3 [shape = 's32[1]{0}', space=sflag, size = 0x4, scoped, tag = 'scoped memory for tpu_custom_call.1']
    %8 = vsyncpa [#allocation3], 0
    // Predicated region
    $region2: #{tpu_custom_call.1} parent=1 // pred_check
      _
    $region3: #{tpu_custom_call.1} parent=1 // pred_check_branch
      %10 = sbr.rel (0) target = $region5
    $region4: #{tpu_custom_call.1} parent=1 // pred_region
      _
    $region5: #{tpu_custom_call.1} parent=1 // pred_fallthru
      _
    // Predicated region
    $region6: #{tpu_custom_call.1} parent=1 // pred_check
      _
    $region7: #{tpu_custom_call.1} parent=1 // pred_check_branch
      %12 = sbr.rel (0) target = $region9
    $region8: #{tpu_custom_call.1} parent=1 // pred_region
      _
    $region9: #{tpu_custom_call.1} parent=1 // pred_fallthru
      _
    // Predicated region
    $region10: #{tpu_custom_call.1} parent=1 // pred_check
      _
    $region11: #{tpu_custom_call.1} parent=1 // pred_check_branch
      %14 = sbr.rel (0) target = $region13
    $region12: #{tpu_custom_call.1} parent=1 // pred_region
      _
    $region13: #{tpu_custom_call.1} parent=1 // pred_fallthru
      _
    %v15 = vld [vmem:[%s0] sm:$0x3]
    %v16 = vld [vmem:[%s1] sm:$0xff]
    %v17 = vld [vmem:[%s1 + $0x8] sm:$0xff]
    %v18 = vld [vmem:[%s1 + $0x10] sm:$0xff]
    %v19 = vld [vmem:[%s1 + $0x18] sm:$0xff]
    %v20 = vld [vmem:[%s1 + $0x20] sm:$0xff]
    %v21 = vld [vmem:[%s1 + $0x28] sm:$0xff]
    %v22 = vld [vmem:[%s1 + $0x30] sm:$0xff]
    %v23 = vld [vmem:[%s1 + $0x38] sm:$0xff]
    %v24 = vld [vmem:[%s2] sm:$0x1]
    %v26 = vperm.slane %v24, 0
    %vm28 = vcmask 523264
    %v30 = vsel %vm28, %v15, 0
    %32 = vmatpush.msra.mxu0 0.0
    %33 = vmatpush.msra.mxu0 0.0
    %34 = vmatpush.msra.mxu0 0.0
    %35 = vmatpush.msra.mxu0 0.0
    %36 = vmatpush.msra.mxu0 0.0
    %37 = vmatpush.msra.mxu0 0.0
    %38 = vmatpush.msra.mxu0 0.0
    %39 = vmatpush.msra.mxu0 0.0
    %40 = vmatpush.msra.mxu0 %v23
    %41 = vmatpush.msra.mxu0 %v22
    %42 = vmatpush.msra.mxu0 %v21
    %43 = vmatpush.msra.mxu0 %v20
    %44 = vmatpush.msra.mxu0 %v19
    %45 = vmatpush.msra.mxu0 %v18
    %46 = vmatpush.msra.mxu0 %v17
    %47 = vmatpush.msra.mxu0 %v16
    %48 = vmatmul.f32.gmra.mxu0 %v30
    %v49 = vpop.f32.mrf.mxu0
    %v50 = vadd.f32 %v26, %v49
    %51 = vdwg.mxu0
    %vm52 = vcmask 58368
    %53 = vst.msk [vmem:[#allocation2] sm:$0x3] %vm52, %v50
    // Predicated region
    $region14: #{tpu_custom_call.1} parent=1 // pred_check
      _
    $region15: #{tpu_custom_call.1} parent=1 // pred_check_branch
      %55 = sbr.rel (0) target = $region17
    $region16: #{tpu_custom_call.1} parent=1 // pred_region
      %57 = vsyncadd [#allocation3], 0
      %s59 = sshll.u32 [#allocation2], 4
      %s60 = int_to_ptr.vmem [resolvable:$true] %s59
      %s61 = sshll.u32 %s3, 4
      %s62 = int_to_ptr.hbm [resolvable:$true] %s61
      %64 = dma.vmem_to_hbm [thread:$0]  %s60, 32, %s62, [#allocation3]
    $region17: #{tpu_custom_call.1} parent=1 // pred_fallthru
      _
    // Predicated region
    $region18: #{tpu_custom_call.1} parent=1 // pred_check
      _
    $region19: #{tpu_custom_call.1} parent=1 // pred_check_branch
      %66 = sbr.rel (0) target = $region21
    $region20: #{tpu_custom_call.1} parent=1 // pred_region
      %68 = dma.done [#allocation3], 32
    $region21: #{tpu_custom_call.1} parent=1 // pred_fallthru
      _
    %69 = vsyncpa [#allocation3], 1

</llo_original>
